<compile_context>
chip_gen: v5e
topology: v5e:2x2
jax: 0.10.0
libtpu: 0.0.40
codegen_flags: <defaults>
</compile_context>

<pallas_src>
import functools

import jax
import jax.numpy as jnp
from jax.experimental import pallas as pl
from jax.experimental.pallas import tpu as pltpu

LANE = 128            # vreg lane width
SUBLANE = 8           # f32 sublane tile
MAX_BLOCK_ROWS = 4096  # 4096 x 128 f32 = 2 MiB per input block (fits all gens)
NUM_SPLITS = 2         # leading "parallel" axis; feeds both TensorCores on v7x


def _round_up(x, m):
    return ((x + m - 1) // m) * m


def _iou_partials_kernel(x_ref, t_ref, inter_ref, total_ref, *,
                         steps_per_split, total_blocks, block_rows,
                         valid_rows, needs_tail_mask, overcovered):
    s = pl.program_id(0)          # split (parallel axis)
    i = pl.program_id(1)          # step within split (arbitrary / reduction axis)
    blk = s * steps_per_split + i  # global block index

    @pl.when(i == 0)
    def _init():
        inter_ref[...] = jnp.zeros_like(inter_ref)
        total_ref[...] = jnp.zeros_like(total_ref)

    def accumulate(masked):
        # sigmoid(x) > 0.5  <=>  x > 0  (monotone, sigmoid(0)=0.5): no EUP work.
        pos = x_ref[...] > 0
        tgt = t_ref[...].astype(jnp.float32)
        if masked:
            # Only the clipped last block reads past the array; mask those rows.
            row_ids = (jax.lax.broadcasted_iota(jnp.int32, x_ref.shape, 0)
                       + blk * block_rows)
            in_range = row_ids < valid_rows
            pos = jnp.logical_and(pos, in_range)
            tgt = jnp.where(in_range, tgt, 0.0)
        res = jnp.where(pos, 1.0, 0.0).astype(jnp.float32)
        # Sublane-grouped fold: reshape keeps the (8,128) vreg tile intact, so
        # the sum over axis 0 is pure VPU vreg adds (no XLU transpose) and the
        # resident accumulator is a single vreg per quantity (vst-slot relief).
        inter_ref[...] += jnp.sum((res * tgt).reshape(-1, SUBLANE, LANE), axis=0)
        total_ref[...] += jnp.sum((res + tgt).reshape(-1, SUBLANE, LANE), axis=0)

    last_blk = total_blocks - 1
    if needs_tail_mask:
        # Pay the iota/cmp/where cost only on the single clipped last block.
        @pl.when(blk < last_blk)
        def _():
            accumulate(False)

        @pl.when(blk == last_blk)
        def _():
            accumulate(True)
    elif overcovered:
        # Grid overshoots total_blocks (uneven split): skip the dead cells.
        @pl.when(blk <= last_blk)
        def _():
            accumulate(False)
    else:
        accumulate(False)


def iou_loss(inputs, targets, smooth=1.0, num_splits=NUM_SPLITS):
    """Pallas TPU implementation of IoULoss.forward (returns scalar f32)."""
    x = inputs.reshape(-1)
    t = targets.reshape(-1)
    n = x.shape[0]

    n_main = (n // LANE) * LANE
    rows = n_main // LANE
    tail = n - n_main

    # <=127-element ragged tail folded in on the wrapper side (no full-array pad,
    # which would double HBM traffic in front of an HBM-bound kernel).
    tail_inter = jnp.float32(0.0)
    tail_total = jnp.float32(0.0)
    if tail > 0:
        x_tail = x[n_main:]
        t_tail = t[n_main:].astype(jnp.float32)
        res_tail = (x_tail > 0).astype(jnp.float32)
        tail_inter = jnp.sum(res_tail * t_tail)
        tail_total = jnp.sum(res_tail + t_tail)

    if rows == 0:
        intersection = tail_inter
        total = tail_total
    else:
        # TODO(synk): confirm in HLO that this prefix slice + reshape does not
        # materialize a copy; if it does, fall back to memory_space=pl.ANY plus
        # a manual DMA for the ragged tail.
        x2 = x[:n_main].reshape(rows, LANE)
        t2 = t[:n_main].reshape(rows, LANE)

        num_splits = max(1, min(int(num_splits), rows))
        # Sublane pack for the narrowest streamed dtype (f32:8, bf16:16, int8:32).
        sub = SUBLANE * max(1, 4 // x2.dtype.itemsize, 4 // t2.dtype.itemsize)
        block_rows = min(MAX_BLOCK_ROWS,
                         max(sub, _round_up(pl.cdiv(rows, num_splits), sub)))
        total_blocks = int(pl.cdiv(rows, block_rows))
        steps_per_split = int(pl.cdiv(total_blocks, num_splits))
        needs_tail_mask = (rows % block_rows) != 0
        overcovered = num_splits * steps_per_split > total_blocks

        kernel = functools.partial(
            _iou_partials_kernel,
            steps_per_split=steps_per_split,
            total_blocks=total_blocks,
            block_rows=int(block_rows),
            valid_rows=int(rows),
            needs_tail_mask=bool(needs_tail_mask),
            overcovered=bool(overcovered),
        )

        def in_map(s, i):
            # Clamp so dead (overcovered) grid cells never index past the array.
            return (jnp.minimum(s * steps_per_split + i, total_blocks - 1), 0)

        # 2 double-buffered input streams + elementwise temporaries + headroom.
        block_in_bytes = block_rows * LANE * (x2.dtype.itemsize + t2.dtype.itemsize)
        block_f32_bytes = block_rows * LANE * 4
        vmem_limit = int(min(64 << 20,
                             max(32 << 20,
                                 2 * block_in_bytes + 6 * block_f32_bytes + (2 << 20))))

        inter_out, total_out = pl.pallas_call(
            kernel,
            out_shape=(
                jax.ShapeDtypeStruct((num_splits * SUBLANE, LANE), jnp.float32),
                jax.ShapeDtypeStruct((num_splits * SUBLANE, LANE), jnp.float32),
            ),
            grid_spec=pltpu.PrefetchScalarGridSpec(
                num_scalar_prefetch=0,
                grid=(num_splits, steps_per_split),
                in_specs=[
                    pl.BlockSpec((block_rows, LANE), in_map),
                    pl.BlockSpec((block_rows, LANE), in_map),
                ],
                out_specs=[
                    pl.BlockSpec((SUBLANE, LANE), lambda s, i: (s, 0)),
                    pl.BlockSpec((SUBLANE, LANE), lambda s, i: (s, 0)),
                ],
            ),
            compiler_params=pltpu.CompilerParams(
                dimension_semantics=("parallel", "arbitrary"),
                vmem_limit_bytes=vmem_limit,
            ),
        )(x2, t2)

        intersection = jnp.sum(inter_out) + tail_inter
        total = jnp.sum(total_out) + tail_total

    union = total - intersection
    smooth = jnp.float32(smooth)
    return (1.0 - (intersection + smooth) / (union + smooth)).astype(jnp.float32)


def _reference_iou_loss(inputs, targets, smooth=1.0):
    probs = jax.nn.sigmoid(inputs.reshape(-1).astype(jnp.float32))
    results = (probs > 0.5).astype(jnp.float32)
    tgt = targets.reshape(-1).astype(jnp.float32)
    intersection = jnp.sum(results * tgt)
    total = jnp.sum(results + tgt)
    union = total - intersection
    return 1.0 - (intersection + smooth) / (union + smooth)


if __name__ == "__main__":
    key = jax.random.PRNGKey(0)
    k1, k2, k3, k4, k5, k6 = jax.random.split(key, 6)

    # Segmentation-style logits / binary targets, NCHW (lane-aligned size).
    inputs = jax.random.normal(k1, (2, 4, 16, 16), dtype=jnp.float32)
    targets = (jax.random.uniform(k2, (2, 4, 16, 16)) > 0.5).astype(jnp.float32)
    loss = jax.block_until_ready(iou_loss(inputs, targets, smooth=1.0))
    ref = jax.block_until_ready(_reference_iou_loss(inputs, targets, smooth=1.0))
    assert jnp.allclose(loss, ref, atol=1e-6, rtol=1e-6), (loss, ref)

    # Non-lane-aligned size: exercises the clipped/masked last block + wrapper-side tail.
    inputs2 = jax.random.normal(k3, (1, 3, 200, 300), dtype=jnp.float32)
    targets2 = (jax.random.uniform(k4, (1, 3, 200, 300)) > 0.5).astype(jnp.float32)
    loss2 = jax.block_until_ready(iou_loss(inputs2, targets2, smooth=1.0))
    ref2 = jax.block_until_ready(_reference_iou_loss(inputs2, targets2, smooth=1.0))
    assert jnp.allclose(loss2, ref2, atol=1e-6, rtol=1e-6), (loss2, ref2)

    # Narrow-dtype streaming path (bf16 logits / bf16 targets; halves HBM bytes).
    # Note: x > 0 on bf16 can differ from sigmoid(x) > 0.5 only for values that
    # round to exactly 0.0 — negligible for real logits.
    inputs3 = jax.random.normal(k5, (2, 1, 64, 64), dtype=jnp.bfloat16)
    targets3 = (jax.random.uniform(k6, (2, 1, 64, 64)) > 0.5).astype(jnp.bfloat16)
    loss3 = jax.block_until_ready(iou_loss(inputs3, targets3, smooth=1.0))
    ref3 = jax.block_until_ready(_reference_iou_loss(inputs3, targets3, smooth=1.0))
    assert jnp.allclose(loss3, ref3, atol=1e-6, rtol=1e-6), (loss3, ref3)

    print("KERNEL_OK")
</pallas_src>

<mosaic_0001>
module attributes {stable_mosaic.version = 11 : i64} {
  func.func @_iou_partials_kernel(%arg0: i32, %arg1: i32, %arg2: memref<8x128xf32, #tpu.memory_space<vmem>>, %arg3: memref<8x128xf32, #tpu.memory_space<vmem>>, %arg4: memref<8x128xf32, #tpu.memory_space<vmem>>, %arg5: memref<8x128xf32, #tpu.memory_space<vmem>>) attributes {dimension_semantics = [#tpu.dimension_semantics<parallel>, #tpu.dimension_semantics<arbitrary>], iteration_bounds = array<i64: 2, 1>, scalar_prefetch = 0 : i64, scratch_operands = 0 : i64, tpu.core_type = #tpu.core_type<tc>, window_params = [{transform_indices = @transform_0, window_bounds = array<i64: 8, 128>}, {transform_indices = @transform_1, window_bounds = array<i64: 8, 128>}, {transform_indices = @transform_2, window_bounds = array<i64: 8, 128>}, {transform_indices = @transform_3, window_bounds = array<i64: 8, 128>}]} {
    %c0_i32 = arith.constant 0 : i32
    %0 = arith.cmpi eq, %arg1, %c0_i32 : i32
    %1 = arith.extui %0 : i1 to i32
    %c0_i32_0 = arith.constant 0 : i32
    %2 = arith.cmpi ne, %1, %c0_i32_0 : i32
    scf.if %2 {
      %cst_16 = arith.constant 0.000000e+00 : f32
      %22 = vector.broadcast %cst_16 : f32 to vector<8x128xf32>
      %c0_17 = arith.constant 0 : index
      %c0_18 = arith.constant 0 : index
      %23 = vector.load %arg4[%c0_17, %c0_18] : memref<8x128xf32, #tpu.memory_space<vmem>>, vector<8x128xf32>
      tpu.vector_store %arg4[%c0_17, %c0_18], %22 {strides = array<i32>} : memref<8x128xf32, #tpu.memory_space<vmem>>, vector<8x128xf32>,
      %cst_19 = arith.constant 0.000000e+00 : f32
      %24 = vector.broadcast %cst_19 : f32 to vector<8x128xf32>
      %c0_20 = arith.constant 0 : index
      %c0_21 = arith.constant 0 : index
      %25 = vector.load %arg5[%c0_20, %c0_21] : memref<8x128xf32, #tpu.memory_space<vmem>>, vector<8x128xf32>
      tpu.vector_store %arg5[%c0_20, %c0_21], %24 {strides = array<i32>} : memref<8x128xf32, #tpu.memory_space<vmem>>, vector<8x128xf32>,
    } else {
    }
    %c0 = arith.constant 0 : index
    %c0_1 = arith.constant 0 : index
    %3 = vector.load %arg2[%c0, %c0_1] : memref<8x128xf32, #tpu.memory_space<vmem>>, vector<8x128xf32>
    %cst = arith.constant 0.000000e+00 : f32
    %4 = vector.broadcast %cst : f32 to vector<8x128xf32>
    %5 = arith.cmpf ogt, %3, %4 : vector<8x128xf32>
    %c0_2 = arith.constant 0 : index
    %c0_3 = arith.constant 0 : index
    %6 = vector.load %arg3[%c0_2, %c0_3] : memref<8x128xf32, #tpu.memory_space<vmem>>, vector<8x128xf32>
    %cst_4 = arith.constant 1.000000e+00 : f32
    %cst_5 = arith.constant 0.000000e+00 : f32
    %7 = vector.broadcast %cst_4 : f32 to vector<8x128xf32>
    %8 = vector.broadcast %cst_5 : f32 to vector<8x128xf32>
    %9 = arith.select %5, %7, %8 : vector<8x128xi1>, vector<8x128xf32>
    %c0_6 = arith.constant 0 : index
    %c0_7 = arith.constant 0 : index
    %10 = vector.load %arg4[%c0_6, %c0_7] : memref<8x128xf32, #tpu.memory_space<vmem>>, vector<8x128xf32>
    %11 = arith.mulf %9, %6 : vector<8x128xf32>
    %12 = vector.shape_cast %11 : vector<8x128xf32> to vector<1x8x128xf32>
    %cst_8 = arith.constant dense<0.000000e+00> : vector<8x128xf32>
    %13 = vector.multi_reduction <add>, %12, %cst_8 [0] : vector<1x8x128xf32> to vector<8x128xf32>
    %14 = arith.addf %10, %13 : vector<8x128xf32>
    %c0_9 = arith.constant 0 : index
    %c0_10 = arith.constant 0 : index
    %15 = vector.load %arg4[%c0_9, %c0_10] : memref<8x128xf32, #tpu.memory_space<vmem>>, vector<8x128xf32>
    tpu.vector_store %arg4[%c0_9, %c0_10], %14 {strides = array<i32>} : memref<8x128xf32, #tpu.memory_space<vmem>>, vector<8x128xf32>,
    %c0_11 = arith.constant 0 : index
    %c0_12 = arith.constant 0 : index
    %16 = vector.load %arg5[%c0_11, %c0_12] : memref<8x128xf32, #tpu.memory_space<vmem>>, vector<8x128xf32>
    %17 = arith.addf %9, %6 : vector<8x128xf32>
    %18 = vector.shape_cast %17 : vector<8x128xf32> to vector<1x8x128xf32>
    %cst_13 = arith.constant dense<0.000000e+00> : vector<8x128xf32>
    %19 = vector.multi_reduction <add>, %18, %cst_13 [0] : vector<1x8x128xf32> to vector<8x128xf32>
    %20 = arith.addf %16, %19 : vector<8x128xf32>
    %c0_14 = arith.constant 0 : index
    %c0_15 = arith.constant 0 : index
    %21 = vector.load %arg5[%c0_14, %c0_15] : memref<8x128xf32, #tpu.memory_space<vmem>>, vector<8x128xf32>
    tpu.vector_store %arg5[%c0_14, %c0_15], %20 {strides = array<i32>} : memref<8x128xf32, #tpu.memory_space<vmem>>, vector<8x128xf32>,
    return
  }
  func.func @transform_0(%arg0: i32, %arg1: i32) -> (i32, i32) {
    %c1_i32 = arith.constant 1 : i32
    %0 = arith.muli %arg0, %c1_i32 : i32
    %1 = arith.addi %0, %arg1 : i32
    %c1_i32_0 = arith.constant 1 : i32
    %2 = arith.minsi %1, %c1_i32_0 : i32
    %c0_i32 = arith.constant 0 : i32
    %c0_i32_1 = arith.constant 0 : i32
    return %2, %c0_i32 : i32, i32
  }
  func.func @transform_1(%arg0: i32, %arg1: i32) -> (i32, i32) {
    %c1_i32 = arith.constant 1 : i32
    %0 = arith.muli %arg0, %c1_i32 : i32
    %1 = arith.addi %0, %arg1 : i32
    %c1_i32_0 = arith.constant 1 : i32
    %2 = arith.minsi %1, %c1_i32_0 : i32
    %c0_i32 = arith.constant 0 : i32
    %c0_i32_1 = arith.constant 0 : i32
    return %2, %c0_i32 : i32, i32
  }
  func.func @transform_2(%arg0: i32, %arg1: i32) -> (i32, i32) {
    %c0_i32 = arith.constant 0 : i32
    %c0_i32_0 = arith.constant 0 : i32
    return %arg0, %c0_i32 : i32, i32
  }
  func.func @transform_3(%arg0: i32, %arg1: i32) -> (i32, i32) {
    %c0_i32 = arith.constant 0 : i32
    %c0_i32_0 = arith.constant 0 : i32
    return %arg0, %c0_i32 : i32, i32
  }
}

</mosaic_0001>

<llo_original>
// kernel: tpu_custom_call.1
$region0: #{tpu_custom_call.1}
  #allocation0 [shape = 'u32[]', space=smem, size = 0x4, offset = 0x4, fixed_abs, tag = 'smem constant byte address 0x4 - core index']
  #allocation1 [shape = 'u32[72,128]{1,0:T(1,128)}', space=vmem, size = 0x9000, scoped, tag = 'internal scratch']
  %s0 = inlined_call_operand.hbm [shape: f32[16,128], index: 0, kind: input, shape index: {}]
  %s1 = inlined_call_operand.hbm [shape: f32[16,128], index: 1, kind: input, shape index: {}]
  %s2 = inlined_call_operand.hbm [shape: f32[16,128], index: 2, kind: output, shape index: {0}]
  %s3 = inlined_call_operand.hbm [shape: f32[16,128], index: 3, kind: output, shape index: {1}]
  %4 = xla_tuple %s2, %s3
  %s5 = sld [smem:[#allocation0]]
  $region61: #{tpu_custom_call.1} parent=0
    _
  %s7 = ssub.s32 1, %s5
  %s8 = scalar_select 0, %s7, %s5
  $region1: #{tpu_custom_call.1} parent=0
    #allocation2 [shape = 'u8[8192]{0}', space=vmem, size = 0x2000, scoped, tag = 'input window, operand 0']
    #allocation3 [shape = 's32[2]{0}', space=sflag, size = 0x8, scoped, tag = 'scoped memory for tpu_custom_call.1']
    #allocation4 [shape = 's32[2]{0}', space=sflag, size = 0x8, scoped, tag = 'scoped memory for tpu_custom_call.1']
    #allocation5 [shape = 'u8[8192]{0}', space=vmem, size = 0x2000, scoped, tag = 'input window, operand 1']
    #allocation6 [shape = 's32[2]{0}', space=sflag, size = 0x8, scoped, tag = 'scoped memory for tpu_custom_call.1']
    #allocation7 [shape = 'u8[8192]{0}', space=vmem, size = 0x2000, scoped, tag = 'output window, operand 0']
    #allocation8 [shape = 'u8[8192]{0}', space=vmem, size = 0x2000, scoped, tag = 'output window, operand 1']
    #allocation9 [shape = 's32[2]{0}', space=sflag, size = 0x8, scoped, tag = 'scoped memory for tpu_custom_call.1']
    %9 = vsyncpa [#allocation3], 0
    %s10 = scalar_lea.sflag [#allocation3], 1
    %11 = vsyncpa %s10, 0
    %12 = vsyncpa [#allocation6], 0
    %s13 = scalar_lea.sflag [#allocation6], 1
    %14 = vsyncpa %s13, 0
    %15 = vsyncpa [#allocation4], 0
    %s16 = scalar_lea.sflag [#allocation4], 1
    %17 = vsyncpa %s16, 0
    %18 = vsyncpa [#allocation9], 0
    %s19 = scalar_lea.sflag [#allocation9], 1
    %20 = vsyncpa %s19, 0
    loop: start=0, step=1, limit=4
    $region2: #{tpu_custom_call.1} parent=1 // loop_pre_header
      _
    $region3: #{tpu_custom_call.1} parent=1 // loop_header
      %s22 = sphi 0, %s26
      %p23 = scmp.ge.s32.totalorder %s22, 4
      %s29 = sphi 0, %s41
      %s30 = sphi 0, %s37
      %s31 = sphi 0, %s29
      %s32 = sphi 0, %s30
      %s33 = sphi 0, %s31
      %s34 = sphi 0, %s32
      %s50 = sphi 0, %s52
      %s53 = sphi 0, %s50
      %s54 = sphi 0, %s53
      %s70 = sphi 0, %s54
      %s82 = sphi 0, %s84
      %s85 = sphi 0, %s82
      %s86 = sphi 0, %s85
      %s102 = sphi 0, %s86
      %s108 = sphi 0, %s110
      %s111 = sphi 0, %s108
      %s112 = sphi 0, %s111
      %s128 = sphi 0, %s112
      %s134 = sphi 0, %s136
      %s137 = sphi 0, %s134
      %s138 = sphi 0, %s137
      %s154 = sphi 0, %s138
    $region4: #{tpu_custom_call.1} parent=1 // loop_header_branch
      %25 = sbr.rel (%p23) target = $region8
    $region5: #{tpu_custom_call.1} parent=1 // loop_body
      %s27 = ssub.s32 %s22, 1
      %s28 = ssub.s32 %s22, 2
      %s35 = sadd.s32 1, %s30
      %p36 = scmp.ge.s32.totalorder %s35, 1
      %s37 = scalar_select %p36, 0, %s35
      %s38 = sadd.s32 1, %s29
      %s39 = scalar_select %p36, %s38, %s29
      %p40 = scmp.ge.s32.totalorder %s39, 2
      %s41 = scalar_select %p40, 0, %s39
      %s42 = sadd.s32 %s29, %s30
      %p43 = scmp.lt.s32.totalorder %s42, 1
      %s44 = scalar_select %p43, %s42, 1
      %s45 = sadd.s32 %s41, %s37
      %p46 = scmp.lt.s32.totalorder %s45, 1
      %s47 = scalar_select %p46, %s45, 1
      %s48 = ssub.s32 %s44, %s47
      %p49 = scmp.eq.s32.totalorder %s48, 0
      %s51 = sadd.s32 %s50, 1
      %s52 = scalar_select %p49, %s50, %s51
      %p55 = pneg %p49
      %p56 = scmp.eq.s32.totalorder %s22, 1
      %p57 = por %p55, %p56
      %p58 = scmp.ne.s32.totalorder %s50, %s53
      %p59 = scmp.eq.s32.totalorder %s22, 0
      %p60 = por %p58, %p59
      %p61 = scmp.ne.s32.totalorder %s50, %s53
      %p62 = scmp.eq.s32.totalorder %s27, 1
      %p63 = por %p61, %p62
      %p64 = scmp.ne.s32.totalorder %s53, %s54
      %p65 = scmp.eq.s32.totalorder %s27, 0
      %p66 = por %p64, %p65
      %p67 = scmp.ne.s32.totalorder %s53, %s54
      %p68 = scmp.eq.s32.totalorder %s28, 1
      %p69 = por %p67, %p68
      %p71 = scmp.ne.s32.totalorder %s54, %s70
      %p72 = scmp.eq.s32.totalorder %s28, 0
      %p73 = por %p71, %p72
      %s74 = sadd.s32 %s29, %s30
      %p75 = scmp.lt.s32.totalorder %s74, 1
      %s76 = scalar_select %p75, %s74, 1
      %s77 = sadd.s32 %s41, %s37
      %p78 = scmp.lt.s32.totalorder %s77, 1
      %s79 = scalar_select %p78, %s77, 1
      %s80 = ssub.s32 %s76, %s79
      %p81 = scmp.eq.s32.totalorder %s80, 0
      %s83 = sadd.s32 %s82, 1
      %s84 = scalar_select %p81, %s82, %s83
      %p87 = pneg %p81
      %p88 = scmp.eq.s32.totalorder %s22, 1
      %p89 = por %p87, %p88
      %p90 = scmp.ne.s32.totalorder %s82, %s85
      %p91 = scmp.eq.s32.totalorder %s22, 0
      %p92 = por %p90, %p91
      %p93 = scmp.ne.s32.totalorder %s82, %s85
      %p94 = scmp.eq.s32.totalorder %s27, 1
      %p95 = por %p93, %p94
      %p96 = scmp.ne.s32.totalorder %s85, %s86
      %p97 = scmp.eq.s32.totalorder %s27, 0
      %p98 = por %p96, %p97
      %p99 = scmp.ne.s32.totalorder %s85, %s86
      %p100 = scmp.eq.s32.totalorder %s28, 1
      %p101 = por %p99, %p100
      %p103 = scmp.ne.s32.totalorder %s86, %s102
      %p104 = scmp.eq.s32.totalorder %s28, 0
      %p105 = por %p103, %p104
      %s106 = ssub.s32 %s29, %s41
      %p107 = scmp.eq.s32.totalorder %s106, 0
      %s109 = sadd.s32 %s108, 1
      %s110 = scalar_select %p107, %s108, %s109
      %p113 = pneg %p107
      %p114 = scmp.eq.s32.totalorder %s22, 1
      %p115 = por %p113, %p114
      %p116 = scmp.ne.s32.totalorder %s108, %s111
      %p117 = scmp.eq.s32.totalorder %s22, 0
      %p118 = por %p116, %p117
      %p119 = scmp.ne.s32.totalorder %s108, %s111
      %p120 = scmp.eq.s32.totalorder %s27, 1
      %p121 = por %p119, %p120
      %p122 = scmp.ne.s32.totalorder %s111, %s112
      %p123 = scmp.eq.s32.totalorder %s27, 0
      %p124 = por %p122, %p123
      %p125 = scmp.ne.s32.totalorder %s111, %s112
      %p126 = scmp.eq.s32.totalorder %s28, 1
      %p127 = por %p125, %p126
      %p129 = scmp.ne.s32.totalorder %s112, %s128
      %p130 = scmp.eq.s32.totalorder %s28, 0
      %p131 = por %p129, %p130
      %s132 = ssub.s32 %s29, %s41
      %p133 = scmp.eq.s32.totalorder %s132, 0
      %s135 = sadd.s32 %s134, 1
      %s136 = scalar_select %p133, %s134, %s135
      %p139 = pneg %p133
      %p140 = scmp.eq.s32.totalorder %s22, 1
      %p141 = por %p139, %p140
      %p142 = scmp.ne.s32.totalorder %s134, %s137
      %p143 = scmp.eq.s32.totalorder %s22, 0
      %p144 = por %p142, %p143
      %p145 = scmp.ne.s32.totalorder %s134, %s137
      %p146 = scmp.eq.s32.totalorder %s27, 1
      %p147 = por %p145, %p146
      %p148 = scmp.ne.s32.totalorder %s137, %s138
      %p149 = scmp.eq.s32.totalorder %s27, 0
      %p150 = por %p148, %p149
      %p151 = scmp.ne.s32.totalorder %s137, %s138
      %p152 = scmp.eq.s32.totalorder %s28, 1
      %p153 = por %p151, %p152
      %p155 = scmp.ne.s32.totalorder %s138, %s154
      %p156 = scmp.eq.s32.totalorder %s28, 0
      %p157 = por %p155, %p156
      %p158 = scmp.le.s32.totalorder 1, %s22
      %p159 = scmp.lt.s32.totalorder %s22, 3
      %p160 = pnand %p158, %p159
      %p161 = pneg %p160
      // Predicated region
      $region9: #{tpu_custom_call.1} parent=5 // pred_check
        _
      $region10: #{tpu_custom_call.1} parent=5 // pred_check_branch
        %163 = sbr.rel (%p160) target = $region12
      $region11: #{tpu_custom_call.1} parent=5 // pred_region
        %s164 = ssub.s32 %s22, 1
      $region12: #{tpu_custom_call.1} parent=5 // pred_fallthru
        _
      %p165 = scmp.lt.s32.totalorder %s22, 2
      // Predicated region
      $region13: #{tpu_custom_call.1} parent=5 // pred_check
        %p166 = pneg %p165
      $region14: #{tpu_custom_call.1} parent=5 // pred_check_branch
        %168 = sbr.rel (%p166) target = $region16
      $region15: #{tpu_custom_call.1} parent=5 // pred_region
        // Predicated region
        $region17: #{tpu_custom_call.1} parent=15 // pred_check
          %p169 = pneg %p60
        $region18: #{tpu_custom_call.1} parent=15 // pred_check_branch
          %171 = sbr.rel (%p169) target = $region20
        $region19: #{tpu_custom_call.1} parent=15 // pred_region
          %s172 = sand.u32 %s50, 1
          %s173 = scalar_lea.sflag [#allocation3], %s172
          %s174 = sand.u32 %s50, 1
          %s175 = smul.addr %s174, 8
          %s176 = scalar_lea.vmem [#allocation2], %s175
          %s177 = sadd.s32 %s29, %s30
          %p178 = scmp.lt.s32.totalorder %s177, 1
          %s179 = scalar_select %p178, %s177, 1
          %181 = vsyncadd %s173, 0
          %s182 = smul.addr %s179, 8
          %s183 = scalar_lea.hbm %s0, %s182
          %s185 = sshll.u32 %s183, 4
          %s186 = int_to_ptr.hbm [resolvable:$true] %s185
          %s187 = sshll.u32 %s176, 4
          %s188 = int_to_ptr.vmem [resolvable:$true] %s187
          %190 = dma.hbm_to_vmem [thread:$0]  %s186, 128, %s188, %s173
        $region20: #{tpu_custom_call.1} parent=15 // pred_fallthru
          _
        // Predicated region
        $region21: #{tpu_custom_call.1} parent=15 // pred_check
          %p191 = pneg %p92
        $region22: #{tpu_custom_call.1} parent=15 // pred_check_branch
          %193 = sbr.rel (%p191) target = $region24
        $region23: #{tpu_custom_call.1} parent=15 // pred_region
          %s194 = sand.u32 %s82, 1
          %s195 = scalar_lea.sflag [#allocation6], %s194
          %s196 = sand.u32 %s82, 1
          %s197 = smul.addr %s196, 8
          %s198 = scalar_lea.vmem [#allocation5], %s197
          %s199 = sadd.s32 %s29, %s30
          %p200 = scmp.lt.s32.totalorder %s199, 1
          %s201 = scalar_select %p200, %s199, 1
          %203 = vsyncadd %s195, 0
          %s204 = smul.addr %s201, 8
          %s205 = scalar_lea.hbm %s1, %s204
          %s207 = sshll.u32 %s205, 4
          %s208 = int_to_ptr.hbm [resolvable:$true] %s207
          %s209 = sshll.u32 %s198, 4
          %s210 = int_to_ptr.vmem [resolvable:$true] %s209
          %212 = dma.hbm_to_vmem [thread:$0]  %s208, 128, %s210, %s195
        $region24: #{tpu_custom_call.1} parent=15 // pred_fallthru
          _
      $region16: #{tpu_custom_call.1} parent=5 // pred_fallthru
        _
      %p213 = scmp.le.s32.totalorder 1, %s22
      %p214 = scmp.lt.s32.totalorder %s22, 3
      %p215 = pnand %p213, %p214
      %p216 = pneg %p215
      // Predicated region
      $region25: #{tpu_custom_call.1} parent=5 // pred_check
        _
      $region26: #{tpu_custom_call.1} parent=5 // pred_check_branch
        %218 = sbr.rel (%p215) target = $region28
      $region27: #{tpu_custom_call.1} parent=5 // pred_region
        %s219 = ssub.s32 %s22, 1
        %s220 = sand.u32 %s53, 1
        %s221 = scalar_lea.sflag [#allocation3], %s220
        %s222 = sand.u32 %s53, 1
        %s223 = smul.addr %s222, 8
        %s224 = scalar_lea.vmem [#allocation2], %s223
        // Predicated region
        $region29: #{tpu_custom_call.1} parent=27 // pred_check
          %p225 = pneg %p66
        $region30: #{tpu_custom_call.1} parent=27 // pred_check_branch
          %227 = sbr.rel (%p225) target = $region32
        $region31: #{tpu_custom_call.1} parent=27 // pred_region
          %229 = dma.done %s221, 128
        $region32: #{tpu_custom_call.1} parent=27 // pred_fallthru
          _
        %s230 = sand.u32 %s85, 1
        %s231 = scalar_lea.sflag [#allocation6], %s230
        %s232 = sand.u32 %s85, 1
        %s233 = smul.addr %s232, 8
        %s234 = scalar_lea.vmem [#allocation5], %s233
        // Predicated region
        $region33: #{tpu_custom_call.1} parent=27 // pred_check
          %p235 = pneg %p98
        $region34: #{tpu_custom_call.1} parent=27 // pred_check_branch
          %237 = sbr.rel (%p235) target = $region36
        $region35: #{tpu_custom_call.1} parent=27 // pred_region
          %239 = dma.done %s231, 128
        $region36: #{tpu_custom_call.1} parent=27 // pred_fallthru
          _
        %s240 = sand.u32 %s53, 1
        %s241 = scalar_lea.sflag [#allocation3], %s240
        %s242 = sand.u32 %s53, 1
        %s243 = smul.addr %s242, 8
        %s244 = scalar_lea.vmem [#allocation2], %s243
        %p245 = pneg %p66
        %p246 = pneg %p63
        %s247 = sand.u32 %s85, 1
        %s248 = scalar_lea.sflag [#allocation6], %s247
        %s249 = sand.u32 %s85, 1
        %s250 = smul.addr %s249, 8
        %s251 = scalar_lea.vmem [#allocation5], %s250
        %p252 = pneg %p98
        %p253 = pneg %p95
        %p254 = pneg %p124
        %p255 = pneg %p121
        %s256 = sand.u32 %s111, 1
        %s257 = scalar_lea.sflag [#allocation4], %s256
        %s258 = sand.u32 %s111, 1
        %s259 = smul.addr %s258, 8
        %s260 = scalar_lea.vmem [#allocation7], %s259
        %p261 = pneg %p150
        %p262 = pneg %p147
        %s263 = sand.u32 %s137, 1
        %s264 = scalar_lea.sflag [#allocation9], %s263
        %s265 = sand.u32 %s137, 1
        %s266 = smul.addr %s265, 8
        %s267 = scalar_lea.vmem [#allocation8], %s266
        %s268 = sadd.s32 %s31, %s32
        %p269 = scmp.lt.s32.totalorder %s268, 1
        %s270 = scalar_select %p269, %s268, 1
        %s271 = sadd.s32 %s31, %s32
        %p272 = scmp.lt.s32.totalorder %s271, 1
        %s273 = scalar_select %p272, %s271, 1
        %p274 = scmp.eq.s32.totalorder %s32, 0
        // Predicated region
        $region37: #{tpu_custom_call.1} parent=27 // pred_check
          %p275 = pneg %p274
        $region38: #{tpu_custom_call.1} parent=27 // pred_check_branch
          %277 = sbr.rel (%p275) target = $region40
        $region39: #{tpu_custom_call.1} parent=27 // pred_region
          %278 = vst [vmem:[%s260] sm:$0xff] 0.0
          %279 = vst [vmem:[%s267] sm:$0xff] 0.0
        $region40: #{tpu_custom_call.1} parent=27 // pred_fallthru
          _
        %v280 = vld [vmem:[%s224] sm:$0xff]
        %vm281 = vcmp.gt.f32.partialorder %v280, 0.0
        %v282 = vld [vmem:[%s234] sm:$0xff]
        %v283 = vsel %vm281, 1.0, 0.0
        %v284 = vld [vmem:[%s260] sm:$0xff]
        %v285 = vmul.f32 %v283, %v282
        %v286 = vadd.f32 %v285, 0.0
        %v287 = vadd.f32 %v284, %v286
        %288 = vst [vmem:[%s260] sm:$0xff] %v287
        %v289 = vld [vmem:[%s267] sm:$0xff]
        %v290 = vadd.f32 %v283, %v282
        %v291 = vadd.f32 %v290, 0.0
        %v292 = vadd.f32 %v289, %v291
        %293 = vst [vmem:[%s267] sm:$0xff] %v292
        %s294 = sand.u32 %s111, 1
        %s295 = scalar_lea.sflag [#allocation4], %s294
        %s296 = sand.u32 %s111, 1
        %s297 = smul.addr %s296, 8
        %s298 = scalar_lea.vmem [#allocation7], %s297
        %s299 = sand.u32 %s137, 1
        %s300 = scalar_lea.sflag [#allocation9], %s299
        %s301 = sand.u32 %s137, 1
        %s302 = smul.addr %s301, 8
        %s303 = scalar_lea.vmem [#allocation8], %s302
        // Predicated region
        $region41: #{tpu_custom_call.1} parent=27 // pred_check
          %p304 = pneg %p121
        $region42: #{tpu_custom_call.1} parent=27 // pred_check_branch
          %306 = sbr.rel (%p304) target = $region44
        $region43: #{tpu_custom_call.1} parent=27 // pred_region
          %308 = vsyncadd %s295, 0
          %s309 = smul.addr %s31, 8
          %s310 = scalar_lea.hbm %s2, %s309
          %s312 = sshll.u32 %s298, 4
          %s313 = int_to_ptr.vmem [resolvable:$true] %s312
          %s314 = sshll.u32 %s310, 4
          %s315 = int_to_ptr.hbm [resolvable:$true] %s314
          %317 = dma.vmem_to_hbm [thread:$0]  %s313, 128, %s315, %s295
        $region44: #{tpu_custom_call.1} parent=27 // pred_fallthru
          _
        // Predicated region
        $region45: #{tpu_custom_call.1} parent=27 // pred_check
          %p318 = pneg %p147
        $region46: #{tpu_custom_call.1} parent=27 // pred_check_branch
          %320 = sbr.rel (%p318) target = $region48
        $region47: #{tpu_custom_call.1} parent=27 // pred_region
          %322 = vsyncadd %s300, 0
          %s323 = smul.addr %s31, 8
          %s324 = scalar_lea.hbm %s3, %s323
          %s326 = sshll.u32 %s303, 4
          %s327 = int_to_ptr.vmem [resolvable:$true] %s326
          %s328 = sshll.u32 %s324, 4
          %s329 = int_to_ptr.hbm [resolvable:$true] %s328
          %331 = dma.vmem_to_hbm [thread:$0]  %s327, 128, %s329, %s300
        $region48: #{tpu_custom_call.1} parent=27 // pred_fallthru
          _
      $region28: #{tpu_custom_call.1} parent=5 // pred_fallthru
        _
      %p332 = scmp.le.s32.totalorder 2, %s22
      // Predicated region
      $region49: #{tpu_custom_call.1} parent=5 // pred_check
        %p333 = pneg %p332
      $region50: #{tpu_custom_call.1} parent=5 // pred_check_branch
        %335 = sbr.rel (%p333) target = $region52
      $region51: #{tpu_custom_call.1} parent=5 // pred_region
        %s336 = ssub.s32 %s22, 2
        // Predicated region
        $region53: #{tpu_custom_call.1} parent=51 // pred_check
          %p337 = pneg %p127
        $region54: #{tpu_custom_call.1} parent=51 // pred_check_branch
          %339 = sbr.rel (%p337) target = $region56
        $region55: #{tpu_custom_call.1} parent=51 // pred_region
          %s340 = sand.u32 %s112, 1
          %s341 = scalar_lea.sflag [#allocation4], %s340
          %s342 = sand.u32 %s112, 1
          %s343 = smul.addr %s342, 8
          %s344 = scalar_lea.vmem [#allocation7], %s343
          %346 = dma.done %s341, 128
        $region56: #{tpu_custom_call.1} parent=51 // pred_fallthru
          _
        // Predicated region
        $region57: #{tpu_custom_call.1} parent=51 // pred_check
          %p347 = pneg %p153
        $region58: #{tpu_custom_call.1} parent=51 // pred_check_branch
          %349 = sbr.rel (%p347) target = $region60
        $region59: #{tpu_custom_call.1} parent=51 // pred_region
          %s350 = sand.u32 %s138, 1
          %s351 = scalar_lea.sflag [#allocation9], %s350
          %s352 = sand.u32 %s138, 1
          %s353 = smul.addr %s352, 8
          %s354 = scalar_lea.vmem [#allocation8], %s353
          %356 = dma.done %s351, 128
        $region60: #{tpu_custom_call.1} parent=51 // pred_fallthru
          _
      $region52: #{tpu_custom_call.1} parent=5 // pred_fallthru
        _
    $region6: #{tpu_custom_call.1} parent=1 // loop_footer
      %s26 = sadd.s32 1, %s22
    $region7: #{tpu_custom_call.1} parent=1 // loop_footer_branch
      %21 = sbr.rel target = $region3
    $region8: #{tpu_custom_call.1} parent=1 // loop_exit
      _
    %357 = vsyncpa [#allocation3], 1
    %s358 = scalar_lea.sflag [#allocation3], 1
    %359 = vsyncpa %s358, 1
    %360 = vsyncpa [#allocation6], 1
    %s361 = scalar_lea.sflag [#allocation6], 1
    %362 = vsyncpa %s361, 1
    %363 = vsyncpa [#allocation4], 1
    %s364 = scalar_lea.sflag [#allocation4], 1
    %365 = vsyncpa %s364, 1
    %366 = vsyncpa [#allocation9], 1
    %s367 = scalar_lea.sflag [#allocation9], 1
    %368 = vsyncpa %s367, 1

</llo_original>
